<compile_context>
chip_gen: v6e
topology: v6e:2x2x1
jax: 0.10.0
libtpu: 0.0.40
codegen_flags: <defaults>
</compile_context>

<pallas_src>
import functools

import jax
import jax.numpy as jnp
from jax.experimental import pallas as pl
from jax.experimental.pallas import tpu as pltpu


def _round_up(x, m):
    return ((x + m - 1) // m) * m


def _cdiv(a, b):
    return (a + b - 1) // b


def dynamics_kernel(st_ref, at_ref,
                    w0s_ref, w0a_ref, b0_ref,
                    w1_ref, b1_ref,
                    w2_ref, b2_ref,
                    ot_ref):
    """One batch tile, transposed layout: features on sublanes, batch on lanes."""
    s_bf = st_ref[...].astype(jnp.bfloat16)            # (S, TB)
    a_bf = at_ref[...].astype(jnp.bfloat16)            # (A, TB)

    # Layer 0 (input normalization already folded into w0s / w0a / b0).
    h0 = jnp.dot(w0s_ref[...], s_bf, preferred_element_type=jnp.float32)
    h0 = h0 + jnp.dot(w0a_ref[...], a_bf, preferred_element_type=jnp.float32)
    h0 = jnp.maximum(h0 + b0_ref[...], 0.0).astype(jnp.bfloat16)    # (H0, TB)

    # Layer 1.
    h1 = jnp.dot(w1_ref[...], h0, preferred_element_type=jnp.float32)
    h1 = jnp.maximum(h1 + b1_ref[...], 0.0).astype(jnp.bfloat16)    # (H1, TB)

    # Output layer (no nonlinearity) — lane-dense (O, TB) store.
    out = jnp.dot(w2_ref[...], h1, preferred_element_type=jnp.float32) + b2_ref[...]
    ot_ref[...] = out.astype(ot_ref.dtype)


def dynamics_net_forward_t(s_t, a_t, params, *, block_b=8192):
    """Lane-dense entry: s_t [state_dim, B], a_t [act_dim, B] -> out_t [out_dim, B]."""
    state_dim, B = s_t.shape
    act_dim = a_t.shape[0]
    h0_dim, in_dim = params["w0"].shape
    h1_dim = params["w1"].shape[0]
    out_dim = params["w2"].shape[0]
    assert in_dim == state_dim + act_dim

    # ---- Fold the input normalization into layer 0 (f32, once per call). ----
    inv_s = 1.0 / (params["s_scale"] + 1e-8)            # [state_dim]
    inv_a = 1.0 / (params["a_scale"] + 1e-8)            # [act_dim]
    w0 = params["w0"]                                    # [h0, state_dim+act_dim]
    w0_s = (w0[:, :state_dim] * inv_s[None, :]).astype(jnp.bfloat16)
    w0_a = (w0[:, state_dim:] * inv_a[None, :]).astype(jnp.bfloat16)
    b0 = (params["b0"]
          - w0[:, :state_dim] @ (params["s_shift"] * inv_s)
          - w0[:, state_dim:] @ (params["a_shift"] * inv_a)).reshape(h0_dim, 1)
    w1 = params["w1"].astype(jnp.bfloat16)
    w2 = params["w2"].astype(jnp.bfloat16)
    b1 = params["b1"].reshape(h1_dim, 1)
    b2 = params["b2"].reshape(out_dim, 1)

    # ---- Padding-aware batch tiling (batch lives on the 128-lane axis). ----
    num_blocks = _cdiv(B, block_b)
    if num_blocks == 1 and B >= 1024:
        num_blocks = 2          # let a 2-TensorCore chip (v7x) split the grid
    tb = _round_up(_cdiv(B, num_blocks), 128)
    b_pad = num_blocks * tb
    if b_pad != B:
        s_t = jnp.pad(s_t, ((0, 0), (0, b_pad - B)))
        a_t = jnp.pad(a_t, ((0, 0), (0, b_pad - B)))

    def stream_spec(feat):
        # Streamed along the batch (lane) axis, auto double-buffered.
        return pl.BlockSpec((feat, tb), lambda i: (0, i))

    def resident_spec(arr):
        # Full array, same block every grid step -> stays resident in VMEM.
        return pl.BlockSpec(arr.shape, lambda i: (0, 0))

    out_t = pl.pallas_call(
        dynamics_kernel,
        out_shape=jax.ShapeDtypeStruct((out_dim, b_pad), jnp.float32),
        grid=(num_blocks,),
        in_specs=[
            stream_spec(state_dim),   # s^T
            stream_spec(act_dim),     # a^T
            resident_spec(w0_s),
            resident_spec(w0_a),
            resident_spec(b0),
            resident_spec(w1),
            resident_spec(b1),
            resident_spec(w2),
            resident_spec(b2),
        ],
        out_specs=stream_spec(out_dim),
        compiler_params=pltpu.CompilerParams(
            dimension_semantics=("parallel",),
            vmem_limit_bytes=32 * 1024 * 1024,
        ),
    )(s_t, a_t, w0_s, w0_a, b0, w1, b1, w2, b2)

    return out_t[:, :B] if b_pad != B else out_t


def dynamics_net_forward(s, a, params, *, block_b=8192):
    """Batch-major wrapper matching DynamicsNet.forward: s [B,S], a [B,A] -> [B,O].

    The boundary transposes are layout ops XLA fuses with the producer /
    consumer when this is jitted inside a larger graph; callers that can hand
    over feature-major data should call dynamics_net_forward_t directly.
    """
    out_t = dynamics_net_forward_t(s.T, a.T, params, block_b=block_b)
    return out_t.T


def init_params(key, state_dim, act_dim, hidden=(64, 64), out_dim=None):
    """Deterministic init mimicking torch.nn.Linear (uniform +-1/sqrt(fan_in)).

    Weights are stored in the PyTorch layout [out_features, in_features]."""
    out_dim = state_dim if out_dim is None else out_dim
    layer_sizes = (state_dim + act_dim,) + tuple(hidden) + (out_dim,)
    params = {}
    keys = jax.random.split(key, 2 * (len(layer_sizes) - 1))
    for i in range(len(layer_sizes) - 1):
        fan_in, fan_out = layer_sizes[i], layer_sizes[i + 1]
        bound = float(fan_in) ** -0.5
        params[f"w{i}"] = jax.random.uniform(
            keys[2 * i], (fan_out, fan_in), jnp.float32, -bound, bound)
        params[f"b{i}"] = jax.random.uniform(
            keys[2 * i + 1], (fan_out,), jnp.float32, -bound, bound)
    # default transformations: shift=0, scale=1
    params["s_shift"] = jnp.zeros((state_dim,), jnp.float32)
    params["s_scale"] = jnp.ones((state_dim,), jnp.float32)
    params["a_shift"] = jnp.zeros((act_dim,), jnp.float32)
    params["a_scale"] = jnp.ones((act_dim,), jnp.float32)
    return params


def reference_forward(s, a, params):
    """Pure-f32 JAX reference of DynamicsNet.forward (matches PyTorch math)."""
    s_in = (s - params["s_shift"]) / (params["s_scale"] + 1e-8)
    a_in = (a - params["a_shift"]) / (params["a_scale"] + 1e-8)
    x = jnp.concatenate([s_in, a_in], axis=-1)
    x = jnp.maximum(x @ params["w0"].T + params["b0"], 0.0)
    x = jnp.maximum(x @ params["w1"].T + params["b1"], 0.0)
    return x @ params["w2"].T + params["b2"]


def reference_forward_bf16(s, a, params):
    """Reference matching kernel numerics (folded norm, bf16 MXU, f32 accumulate)."""
    state_dim = s.shape[1]
    inv_s = 1.0 / (params["s_scale"] + 1e-8)
    inv_a = 1.0 / (params["a_scale"] + 1e-8)
    w0 = params["w0"]
    w0_s = (w0[:, :state_dim] * inv_s[None, :]).astype(jnp.bfloat16)
    w0_a = (w0[:, state_dim:] * inv_a[None, :]).astype(jnp.bfloat16)
    b0 = (params["b0"]
          - w0[:, :state_dim] @ (params["s_shift"] * inv_s)
          - w0[:, state_dim:] @ (params["a_shift"] * inv_a))
    h0 = (jnp.dot(w0_s, s.T.astype(jnp.bfloat16), preferred_element_type=jnp.float32)
          + jnp.dot(w0_a, a.T.astype(jnp.bfloat16), preferred_element_type=jnp.float32))
    h0 = jnp.maximum(h0 + b0[:, None], 0.0).astype(jnp.bfloat16)
    h1 = jnp.dot(params["w1"].astype(jnp.bfloat16), h0,
                 preferred_element_type=jnp.float32)
    h1 = jnp.maximum(h1 + params["b1"][:, None], 0.0).astype(jnp.bfloat16)
    out = (jnp.dot(params["w2"].astype(jnp.bfloat16), h1,
                   preferred_element_type=jnp.float32) + params["b2"][:, None])
    return out.T


if __name__ == "__main__":
    key = jax.random.PRNGKey(0)
    (k_param, k_s, k_a, k_sh1, k_sc1, k_sh2, k_sc2, k_s2, k_a2) = jax.random.split(key, 9)

    batch, state_dim, act_dim = 8, 16, 8
    params = init_params(k_param, state_dim, act_dim, hidden=(64, 64))

    # Non-trivial normalization so the layer-0 fold is actually exercised.
    params["s_shift"] = 0.2 * jax.random.normal(k_sh1, (state_dim,), jnp.float32)
    params["s_scale"] = 0.5 + jax.random.uniform(k_sc1, (state_dim,), jnp.float32)
    params["a_shift"] = 0.2 * jax.random.normal(k_sh2, (act_dim,), jnp.float32)
    params["a_scale"] = 0.5 + jax.random.uniform(k_sc2, (act_dim,), jnp.float32)

    s = jax.random.normal(k_s, (batch, state_dim), jnp.float32)
    a = jax.random.normal(k_a, (batch, act_dim), jnp.float32)

    fwd = jax.jit(functools.partial(dynamics_net_forward, block_b=8192))
    out = jax.block_until_ready(fwd(s, a, params))
    assert out.shape == (batch, state_dim)

    # Tight check vs. a reference using the same numerics (fold + bf16 matmuls).
    ref_bf16 = reference_forward_bf16(s, a, params)
    assert jnp.allclose(out, ref_bf16, atol=2e-3, rtol=2e-3)
    # Loose check vs. the exact f32 PyTorch-equivalent forward (bf16 rounding).
    ref_f32 = reference_forward(s, a, params)
    assert jnp.allclose(out, ref_f32, atol=1e-1, rtol=1e-1)

    # Larger batch: exercises padding-aware tiling and the >=2-block split
    # (for the v7x 2-TensorCore parallel axis) plus padded-row slicing.
    B2 = 1200
    s2 = jax.random.normal(k_s2, (B2, state_dim), jnp.float32)
    a2 = jax.random.normal(k_a2, (B2, act_dim), jnp.float32)
    out2 = jax.block_until_ready(dynamics_net_forward(s2, a2, params, block_b=8192))
    assert out2.shape == (B2, state_dim)
    assert jnp.allclose(out2, reference_forward_bf16(s2, a2, params),
                        atol=2e-3, rtol=2e-3)

    # Multi-step grid through the lane-dense (transposed) entry point.
    out3 = jax.block_until_ready(
        dynamics_net_forward_t(s2.T, a2.T, params, block_b=512))
    assert out3.shape == (state_dim, B2)
    assert jnp.allclose(out3.T, reference_forward_bf16(s2, a2, params),
                        atol=2e-3, rtol=2e-3)

    print("KERNEL_OK")
</pallas_src>

<mosaic_0001>
module attributes {stable_mosaic.version = 11 : i64} {
  func.func @dynamics_kernel(%arg0: i32, %arg1: memref<16x128xf32, #tpu.memory_space<vmem>>, %arg2: memref<8x128xf32, #tpu.memory_space<vmem>>, %arg3: memref<64x16xbf16, #tpu.memory_space<vmem>>, %arg4: memref<64x8xbf16, #tpu.memory_space<vmem>>, %arg5: memref<64x1xf32, #tpu.memory_space<vmem>>, %arg6: memref<64x64xbf16, #tpu.memory_space<vmem>>, %arg7: memref<64x1xf32, #tpu.memory_space<vmem>>, %arg8: memref<16x64xbf16, #tpu.memory_space<vmem>>, %arg9: memref<16x1xf32, #tpu.memory_space<vmem>>, %arg10: memref<16x128xf32, #tpu.memory_space<vmem>>) attributes {dimension_semantics = [#tpu.dimension_semantics<parallel>], iteration_bounds = array<i64: 1>, scalar_prefetch = 0 : i64, scratch_operands = 0 : i64, tpu.core_type = #tpu.core_type<tc>, window_params = [{transform_indices = @transform_0, window_bounds = array<i64: 16, 128>}, {transform_indices = @transform_1, window_bounds = array<i64: 8, 128>}, {pipeline_mode = #tpu.pipeline_mode<synchronous>, transform_indices = @transform_2, window_bounds = array<i64: 64, 16>}, {pipeline_mode = #tpu.pipeline_mode<synchronous>, transform_indices = @transform_3, window_bounds = array<i64: 64, 8>}, {pipeline_mode = #tpu.pipeline_mode<synchronous>, transform_indices = @transform_4, window_bounds = array<i64: 64, 1>}, {pipeline_mode = #tpu.pipeline_mode<synchronous>, transform_indices = @transform_5, window_bounds = array<i64: 64, 64>}, {pipeline_mode = #tpu.pipeline_mode<synchronous>, transform_indices = @transform_6, window_bounds = array<i64: 64, 1>}, {pipeline_mode = #tpu.pipeline_mode<synchronous>, transform_indices = @transform_7, window_bounds = array<i64: 16, 64>}, {pipeline_mode = #tpu.pipeline_mode<synchronous>, transform_indices = @transform_8, window_bounds = array<i64: 16, 1>}, {transform_indices = @transform_9, window_bounds = array<i64: 16, 128>}]} {
    %c0 = arith.constant 0 : index
    %c0_0 = arith.constant 0 : index
    %0 = vector.load %arg1[%c0, %c0_0] : memref<16x128xf32, #tpu.memory_space<vmem>>, vector<16x128xf32>
    %1 = arith.truncf %0 : vector<16x128xf32> to vector<16x128xbf16>
    %c0_1 = arith.constant 0 : index
    %c0_2 = arith.constant 0 : index
    %2 = vector.load %arg2[%c0_1, %c0_2] : memref<8x128xf32, #tpu.memory_space<vmem>>, vector<8x128xf32>
    %3 = arith.truncf %2 : vector<8x128xf32> to vector<8x128xbf16>
    %c0_3 = arith.constant 0 : index
    %c0_4 = arith.constant 0 : index
    %4 = vector.load %arg3[%c0_3, %c0_4] : memref<64x16xbf16, #tpu.memory_space<vmem>>, vector<64x16xbf16>
    %cst = arith.constant dense<0.000000e+00> : vector<64x128xf32>
    %5 = tpu.matmul %4, %1, %cst {dimension_numbers = #tpu.dot_dimension_numbers<[1], [0], [0], [1], [0, 0, 1, 1], [], []>} : vector<64x16xbf16>, vector<16x128xbf16>, vector<64x128xf32> -> vector<64x128xf32>
    %c0_5 = arith.constant 0 : index
    %c0_6 = arith.constant 0 : index
    %6 = vector.load %arg4[%c0_5, %c0_6] : memref<64x8xbf16, #tpu.memory_space<vmem>>, vector<64x8xbf16>
    %cst_7 = arith.constant dense<0.000000e+00> : vector<64x128xf32>
    %7 = tpu.matmul %6, %3, %cst_7 {dimension_numbers = #tpu.dot_dimension_numbers<[1], [0], [0], [1], [0, 0, 1, 1], [], []>} : vector<64x8xbf16>, vector<8x128xbf16>, vector<64x128xf32> -> vector<64x128xf32>
    %8 = arith.addf %5, %7 : vector<64x128xf32>
    %c0_8 = arith.constant 0 : index
    %c0_9 = arith.constant 0 : index
    %9 = vector.load %arg5[%c0_8, %c0_9] : memref<64x1xf32, #tpu.memory_space<vmem>>, vector<64x1xf32>
    %10 = vector.broadcast %9 : vector<64x1xf32> to vector<64x128xf32>
    %11 = arith.addf %8, %10 : vector<64x128xf32>
    %cst_10 = arith.constant 0.000000e+00 : f32
    %12 = vector.broadcast %cst_10 : f32 to vector<64x128xf32>
    %13 = arith.maximumf %11, %12 : vector<64x128xf32>
    %14 = arith.truncf %13 : vector<64x128xf32> to vector<64x128xbf16>
    %c0_11 = arith.constant 0 : index
    %c0_12 = arith.constant 0 : index
    %15 = vector.load %arg6[%c0_11, %c0_12] : memref<64x64xbf16, #tpu.memory_space<vmem>>, vector<64x64xbf16>
    %cst_13 = arith.constant dense<0.000000e+00> : vector<64x128xf32>
    %16 = tpu.matmul %15, %14, %cst_13 {dimension_numbers = #tpu.dot_dimension_numbers<[1], [0], [0], [1], [0, 0, 1, 1], [], []>} : vector<64x64xbf16>, vector<64x128xbf16>, vector<64x128xf32> -> vector<64x128xf32>
    %c0_14 = arith.constant 0 : index
    %c0_15 = arith.constant 0 : index
    %17 = vector.load %arg7[%c0_14, %c0_15] : memref<64x1xf32, #tpu.memory_space<vmem>>, vector<64x1xf32>
    %18 = vector.broadcast %17 : vector<64x1xf32> to vector<64x128xf32>
    %19 = arith.addf %16, %18 : vector<64x128xf32>
    %cst_16 = arith.constant 0.000000e+00 : f32
    %20 = vector.broadcast %cst_16 : f32 to vector<64x128xf32>
    %21 = arith.maximumf %19, %20 : vector<64x128xf32>
    %22 = arith.truncf %21 : vector<64x128xf32> to vector<64x128xbf16>
    %c0_17 = arith.constant 0 : index
    %c0_18 = arith.constant 0 : index
    %23 = vector.load %arg8[%c0_17, %c0_18] : memref<16x64xbf16, #tpu.memory_space<vmem>>, vector<16x64xbf16>
    %cst_19 = arith.constant dense<0.000000e+00> : vector<16x128xf32>
    %24 = tpu.matmul %23, %22, %cst_19 {dimension_numbers = #tpu.dot_dimension_numbers<[1], [0], [0], [1], [0, 0, 1, 1], [], []>} : vector<16x64xbf16>, vector<64x128xbf16>, vector<16x128xf32> -> vector<16x128xf32>
    %c0_20 = arith.constant 0 : index
    %c0_21 = arith.constant 0 : index
    %25 = vector.load %arg9[%c0_20, %c0_21] : memref<16x1xf32, #tpu.memory_space<vmem>>, vector<16x1xf32>
    %26 = vector.broadcast %25 : vector<16x1xf32> to vector<16x128xf32>
    %27 = arith.addf %24, %26 : vector<16x128xf32>
    %c0_22 = arith.constant 0 : index
    %c0_23 = arith.constant 0 : index
    %28 = vector.load %arg10[%c0_22, %c0_23] : memref<16x128xf32, #tpu.memory_space<vmem>>, vector<16x128xf32>
    tpu.vector_store %arg10[%c0_22, %c0_23], %27 {strides = array<i32>} : memref<16x128xf32, #tpu.memory_space<vmem>>, vector<16x128xf32>,
    return
  }
  func.func @transform_0(%arg0: i32) -> (i32, i32) {
    %c0_i32 = arith.constant 0 : i32
    %c0_i32_0 = arith.constant 0 : i32
    return %c0_i32, %arg0 : i32, i32
  }
  func.func @transform_1(%arg0: i32) -> (i32, i32) {
    %c0_i32 = arith.constant 0 : i32
    %c0_i32_0 = arith.constant 0 : i32
    return %c0_i32, %arg0 : i32, i32
  }
  func.func @transform_2(%arg0: i32) -> (i32, i32) {
    %c0_i32 = arith.constant 0 : i32
    %c0_i32_0 = arith.constant 0 : i32
    %c0_i32_1 = arith.constant 0 : i32
    return %c0_i32, %c0_i32_0 : i32, i32
  }
  func.func @transform_3(%arg0: i32) -> (i32, i32) {
    %c0_i32 = arith.constant 0 : i32
    %c0_i32_0 = arith.constant 0 : i32
    %c0_i32_1 = arith.constant 0 : i32
    return %c0_i32, %c0_i32_0 : i32, i32
  }
  func.func @transform_4(%arg0: i32) -> (i32, i32) {
    %c0_i32 = arith.constant 0 : i32
    %c0_i32_0 = arith.constant 0 : i32
    %c0_i32_1 = arith.constant 0 : i32
    return %c0_i32, %c0_i32_0 : i32, i32
  }
  func.func @transform_5(%arg0: i32) -> (i32, i32) {
    %c0_i32 = arith.constant 0 : i32
    %c0_i32_0 = arith.constant 0 : i32
    %c0_i32_1 = arith.constant 0 : i32
    return %c0_i32, %c0_i32_0 : i32, i32
  }
  func.func @transform_6(%arg0: i32) -> (i32, i32) {
    %c0_i32 = arith.constant 0 : i32
    %c0_i32_0 = arith.constant 0 : i32
    %c0_i32_1 = arith.constant 0 : i32
    return %c0_i32, %c0_i32_0 : i32, i32
  }
  func.func @transform_7(%arg0: i32) -> (i32, i32) {
    %c0_i32 = arith.constant 0 : i32
    %c0_i32_0 = arith.constant 0 : i32
    %c0_i32_1 = arith.constant 0 : i32
    return %c0_i32, %c0_i32_0 : i32, i32
  }
  func.func @transform_8(%arg0: i32) -> (i32, i32) {
    %c0_i32 = arith.constant 0 : i32
    %c0_i32_0 = arith.constant 0 : i32
    %c0_i32_1 = arith.constant 0 : i32
    return %c0_i32, %c0_i32_0 : i32, i32
  }
  func.func @transform_9(%arg0: i32) -> (i32, i32) {
    %c0_i32 = arith.constant 0 : i32
    %c0_i32_0 = arith.constant 0 : i32
    return %c0_i32, %arg0 : i32, i32
  }
}

</mosaic_0001>

<llo_original>
// kernel: dynamics_net_forward.1
$region0: #{dynamics_net_forward.1}
  #allocation0 [shape = 'u32[]', space=smem, size = 0x4, offset = 0x4, fixed_abs, tag = 'smem constant byte address 0x4 - core index']
  #allocation1 [shape = 'u32[144,128]{1,0:T(1,128)}', space=vmem, size = 0x12000, scoped, tag = 'internal scratch']
  %s0 = inlined_call_operand.vmem [shape: f32[16,128], index: 0, kind: input, shape index: {}]
  %s1 = inlined_call_operand.vmem [shape: f32[8,128], index: 1, kind: input, shape index: {}]
  %s2 = inlined_call_operand.vmem [shape: bf16[64,16], index: 2, kind: input, shape index: {}]
  %s3 = inlined_call_operand.vmem [shape: bf16[64,8], index: 3, kind: input, shape index: {}]
  %s4 = inlined_call_operand.vmem [shape: f32[64,1], index: 4, kind: input, shape index: {}]
  %s5 = inlined_call_operand.vmem [shape: bf16[64,64], index: 5, kind: input, shape index: {}]
  %s6 = inlined_call_operand.vmem [shape: f32[64,1], index: 6, kind: input, shape index: {}]
  %s7 = inlined_call_operand.vmem [shape: bf16[16,64], index: 7, kind: input, shape index: {}]
  %s8 = inlined_call_operand.vmem [shape: f32[16,1], index: 8, kind: input, shape index: {}]
  %s9 = inlined_call_operand.vmem [shape: f32[16,128], index: 9, kind: output, shape index: {}]
  %s10 = sld [smem:[#allocation0]]
  $region46: #{dynamics_net_forward.1} parent=0
    _
  %s12 = ssub.s32 1, %s10
  %s13 = scalar_select 0, %s12, %s10
  // Predicated region
  $region2: #{dynamics_net_forward.1} parent=0 // pred_check
    _
  $region3: #{dynamics_net_forward.1} parent=0 // pred_check_branch
    %15 = sbr.rel (0) target = $region5
  $region4: #{dynamics_net_forward.1} parent=0 // pred_region
    _
  $region5: #{dynamics_net_forward.1} parent=0 // pred_fallthru
    _
  // Predicated region
  $region6: #{dynamics_net_forward.1} parent=0 // pred_check
    _
  $region7: #{dynamics_net_forward.1} parent=0 // pred_check_branch
    %17 = sbr.rel (0) target = $region9
  $region8: #{dynamics_net_forward.1} parent=0 // pred_region
    _
  $region9: #{dynamics_net_forward.1} parent=0 // pred_fallthru
    _
  // Predicated region
  $region10: #{dynamics_net_forward.1} parent=0 // pred_check
    _
  $region11: #{dynamics_net_forward.1} parent=0 // pred_check_branch
    %19 = sbr.rel (0) target = $region13
  $region12: #{dynamics_net_forward.1} parent=0 // pred_region
    _
  $region13: #{dynamics_net_forward.1} parent=0 // pred_fallthru
    _
  // Predicated region
  $region14: #{dynamics_net_forward.1} parent=0 // pred_check
    _
  $region15: #{dynamics_net_forward.1} parent=0 // pred_check_branch
    %21 = sbr.rel (0) target = $region17
  $region16: #{dynamics_net_forward.1} parent=0 // pred_region
    _
  $region17: #{dynamics_net_forward.1} parent=0 // pred_fallthru
    _
  // Predicated region
  $region18: #{dynamics_net_forward.1} parent=0 // pred_check
    _
  $region19: #{dynamics_net_forward.1} parent=0 // pred_check_branch
    %23 = sbr.rel (0) target = $region21
  $region20: #{dynamics_net_forward.1} parent=0 // pred_region
    _
  $region21: #{dynamics_net_forward.1} parent=0 // pred_fallthru
    _
  // Predicated region
  $region22: #{dynamics_net_forward.1} parent=0 // pred_check
    _
  $region23: #{dynamics_net_forward.1} parent=0 // pred_check_branch
    %25 = sbr.rel (0) target = $region25
  $region24: #{dynamics_net_forward.1} parent=0 // pred_region
    _
  $region25: #{dynamics_net_forward.1} parent=0 // pred_fallthru
    _
  // Predicated region
  $region26: #{dynamics_net_forward.1} parent=0 // pred_check
    _
  $region27: #{dynamics_net_forward.1} parent=0 // pred_check_branch
    %27 = sbr.rel (0) target = $region29
  $region28: #{dynamics_net_forward.1} parent=0 // pred_region
    _
  $region29: #{dynamics_net_forward.1} parent=0 // pred_fallthru
    _
  // Predicated region
  $region30: #{dynamics_net_forward.1} parent=0 // pred_check
    _
  $region31: #{dynamics_net_forward.1} parent=0 // pred_check_branch
    %29 = sbr.rel (0) target = $region33
  $region32: #{dynamics_net_forward.1} parent=0 // pred_region
    _
  $region33: #{dynamics_net_forward.1} parent=0 // pred_fallthru
    _
  // Predicated region
  $region34: #{dynamics_net_forward.1} parent=0 // pred_check
    _
  $region35: #{dynamics_net_forward.1} parent=0 // pred_check_branch
    %31 = sbr.rel (0) target = $region37
  $region36: #{dynamics_net_forward.1} parent=0 // pred_region
    _
  $region37: #{dynamics_net_forward.1} parent=0 // pred_fallthru
    _
  %v33 = vld [vmem:[%s0] sm:$0xff]
  %v34 = vld [vmem:[%s0 + $0x8] sm:$0xff]
  %v35 = vpack.c.bf16 %v34, %v33
  %v36 = vld [vmem:[%s1] sm:$0xff]
  %v37 = vpack.c.bf16 %v36, %v36
  %v38 = vld [vmem:[%s2] sm:$0xf]
  %v39 = vld [vmem:[%s2 + $0x4] sm:$0xf]
  %v40 = vld [vmem:[%s2 + $0x8] sm:$0xf]
  %v41 = vld [vmem:[%s2 + $0xc] sm:$0xf]
  %v42 = vld [vmem:[%s2 + $0x10] sm:$0xf]
  %v43 = vld [vmem:[%s2 + $0x14] sm:$0xf]
  %v44 = vld [vmem:[%s2 + $0x18] sm:$0xf]
  %v45 = vld [vmem:[%s2 + $0x1c] sm:$0xf]
  %v46 = vld [vmem:[%s3] sm:$0xf]
  %v47 = vld [vmem:[%s3 + $0x4] sm:$0xf]
  %v48 = vld [vmem:[%s3 + $0x8] sm:$0xf]
  %v49 = vld [vmem:[%s3 + $0xc] sm:$0xf]
  %v50 = vld [vmem:[%s3 + $0x10] sm:$0xf]
  %v51 = vld [vmem:[%s3 + $0x14] sm:$0xf]
  %v52 = vld [vmem:[%s3 + $0x18] sm:$0xf]
  %v53 = vld [vmem:[%s3 + $0x1c] sm:$0xf]
  %v62 = vunpack.c.l.b16 %v46
  %v63 = vunpack.c.l.b16 %v47
  %v64 = vunpack.c.l.b16 %v48
  %v65 = vunpack.c.l.b16 %v49
  %v66 = vunpack.c.l.b16 %v50
  %v67 = vunpack.c.l.b16 %v51
  %v68 = vunpack.c.l.b16 %v52
  %v69 = vunpack.c.l.b16 %v53
  %v70 = vpack.c.b16 %v63, %v62
  %v71 = vpack.c.b16 %v65, %v64
  %v72 = vpack.c.b16 %v67, %v66
  %v73 = vpack.c.b16 %v69, %v68
  %vm74 = vcmask 64512
  %v76 = vsel %vm74, %v70, 0
  %v79 = vsel %vm74, %v71, 0
  %v82 = vsel %vm74, %v72, 0
  %v85 = vsel %vm74, %v73, 0
  %vm87 = vcmask 1043456
  %v89 = vsel %vm87, %v37, 0
  %91 = vmatprep.subr.bf16.mxu0 0
  %92 = vmatpush1.bf16.msra.mxu0 0
  %93 = vmatprep.subr.bf16.mxu0 0
  %94 = vmatpush1.bf16.msra.mxu0 0
  %95 = vmatprep.subr.bf16.mxu0 0
  %96 = vmatpush1.bf16.msra.mxu0 0
  %97 = vmatprep.subr.bf16.mxu0 0
  %98 = vmatpush1.bf16.msra.mxu0 0
  %99 = vmatprep.subr.bf16.mxu0 0
  %100 = vmatpush1.bf16.msra.mxu0 0
  %101 = vmatprep.subr.bf16.mxu0 0
  %102 = vmatpush1.bf16.msra.mxu0 0
  %103 = vmatprep.subr.bf16.mxu0 0
  %104 = vmatpush1.bf16.msra.mxu0 0
  %105 = vmatprep.subr.bf16.mxu0 0
  %106 = vmatpush1.bf16.msra.mxu0 %v89
  %107 = vmatprep.subr.bf16.mxu0 0
  %108 = vmatpush2.bf16.msra.mxu0 0
  %109 = vmatprep.subr.bf16.mxu0 0
  %110 = vmatpush2.bf16.msra.mxu0 0
  %111 = vmatprep.subr.bf16.mxu0 0
  %112 = vmatpush2.bf16.msra.mxu0 0
  %113 = vmatprep.subr.bf16.mxu0 0
  %114 = vmatpush2.bf16.msra.mxu0 0
  %115 = vmatprep.subr.bf16.mxu0 0
  %116 = vmatpush2.bf16.msra.mxu0 0
  %117 = vmatprep.subr.bf16.mxu0 0
  %118 = vmatpush2.bf16.msra.mxu0 0
  %119 = vmatprep.subr.bf16.mxu0 0
  %120 = vmatpush2.bf16.msra.mxu0 0
  %121 = vmatprep.subr.bf16.mxu0 0
  %122 = vmatpush2.bf16.msra.mxu0 0
  %123 = vmatprep.mubr.bf16.mxu0 0
  %124 = vmatmul.mubr.bf16.gmra.mxu0 %v76
  %v125 = vpop.f32.mrf.mxu0
  %v126 = vadd.f32 0.0, %v125
  %v127 = vpop.f32.mrf.mxu0
  %v128 = vpop.f32.mrf.mxu0
  %v129 = vadd.f32 0.0, %v128
  %v130 = vpop.f32.mrf.mxu0
  %131 = vmatprep.mubr.bf16.mxu0 0
  %132 = vmatmul.mubr.bf16.gmra.mxu0 %v79
  %v133 = vpop.f32.mrf.mxu0
  %v134 = vadd.f32 0.0, %v133
  %v135 = vpop.f32.mrf.mxu0
  %v136 = vpop.f32.mrf.mxu0
  %v137 = vadd.f32 0.0, %v136
  %v138 = vpop.f32.mrf.mxu0
  %139 = vmatprep.mubr.bf16.mxu0 0
  %140 = vmatmul.mubr.bf16.gmra.mxu0 %v82
  %v141 = vpop.f32.mrf.mxu0
  %v142 = vadd.f32 0.0, %v141
  %v143 = vpop.f32.mrf.mxu0
  %v144 = vpop.f32.mrf.mxu0
  %v145 = vadd.f32 0.0, %v144
  %v146 = vpop.f32.mrf.mxu0
  %147 = vmatprep.mubr.bf16.mxu0 0
  %148 = vmatmul.mubr.bf16.gmra.mxu0 %v85
  %v149 = vpop.f32.mrf.mxu0
  %v150 = vadd.f32 0.0, %v149
  %v151 = vpop.f32.mrf.mxu0
  %v152 = vpop.f32.mrf.mxu0
  %v153 = vadd.f32 0.0, %v152
  %v154 = vpop.f32.mrf.mxu0
  %155 = vdwg.mxu0
  %v164 = vunpack.c.l.b16 %v38
  %v165 = vunpack.c.l.b16 %v39
  %v166 = vunpack.c.l.b16 %v40
  %v167 = vunpack.c.l.b16 %v41
  %v168 = vunpack.c.l.b16 %v42
  %v169 = vunpack.c.l.b16 %v43
  %v170 = vunpack.c.l.b16 %v44
  %v171 = vunpack.c.l.b16 %v45
  %v172 = vpack.c.b16 %v165, %v164
  %v173 = vpack.c.b16 %v167, %v166
  %v174 = vpack.c.b16 %v169, %v168
  %v175 = vpack.c.b16 %v171, %v170
  %vm176 = vcmask 130048
  %v178 = vsel %vm176, %v172, 0
  %v181 = vsel %vm176, %v173, 0
  %v184 = vsel %vm176, %v174, 0
  %v187 = vsel %vm176, %v175, 0
  %189 = vmatprep.subr.bf16.mxu0 0
  %190 = vmatpush1.bf16.msra.mxu0 0
  %191 = vmatprep.subr.bf16.mxu0 0
  %192 = vmatpush1.bf16.msra.mxu0 0
  %193 = vmatprep.subr.bf16.mxu0 0
  %194 = vmatpush1.bf16.msra.mxu0 0
  %195 = vmatprep.subr.bf16.mxu0 0
  %196 = vmatpush1.bf16.msra.mxu0 0
  %197 = vmatprep.subr.bf16.mxu0 0
  %198 = vmatpush1.bf16.msra.mxu0 0
  %199 = vmatprep.subr.bf16.mxu0 0
  %200 = vmatpush1.bf16.msra.mxu0 0
  %201 = vmatprep.subr.bf16.mxu0 0
  %202 = vmatpush1.bf16.msra.mxu0 0
  %203 = vmatprep.subr.bf16.mxu0 0
  %204 = vmatpush1.bf16.msra.mxu0 %v35
  %205 = vmatprep.subr.bf16.mxu0 0
  %206 = vmatpush2.bf16.msra.mxu0 0
  %207 = vmatprep.subr.bf16.mxu0 0
  %208 = vmatpush2.bf16.msra.mxu0 0
  %209 = vmatprep.subr.bf16.mxu0 0
  %210 = vmatpush2.bf16.msra.mxu0 0
  %211 = vmatprep.subr.bf16.mxu0 0
  %212 = vmatpush2.bf16.msra.mxu0 0
  %213 = vmatprep.subr.bf16.mxu0 0
  %214 = vmatpush2.bf16.msra.mxu0 0
  %215 = vmatprep.subr.bf16.mxu0 0
  %216 = vmatpush2.bf16.msra.mxu0 0
  %217 = vmatprep.subr.bf16.mxu0 0
  %218 = vmatpush2.bf16.msra.mxu0 0
  %219 = vmatprep.subr.bf16.mxu0 0
  %220 = vmatpush2.bf16.msra.mxu0 0
  %221 = vmatprep.mubr.bf16.mxu0 0
  %222 = vmatmul.mubr.bf16.gmra.mxu0 %v178
  %v223 = vpop.f32.mrf.mxu0
  %v224 = vadd.f32 %v126, %v223
  %v225 = vpop.f32.mrf.mxu0
  %v226 = vpop.f32.mrf.mxu0
  %v227 = vadd.f32 %v129, %v226
  %v228 = vpop.f32.mrf.mxu0
  %229 = vmatprep.mubr.bf16.mxu0 0
  %230 = vmatmul.mubr.bf16.gmra.mxu0 %v181
  %v231 = vpop.f32.mrf.mxu0
  %v232 = vadd.f32 %v134, %v231
  %v233 = vpop.f32.mrf.mxu0
  %v234 = vpop.f32.mrf.mxu0
  %v235 = vadd.f32 %v137, %v234
  %v236 = vpop.f32.mrf.mxu0
  %237 = vmatprep.mubr.bf16.mxu0 0
  %238 = vmatmul.mubr.bf16.gmra.mxu0 %v184
  %v239 = vpop.f32.mrf.mxu0
  %v240 = vadd.f32 %v142, %v239
  %v241 = vpop.f32.mrf.mxu0
  %v242 = vpop.f32.mrf.mxu0
  %v243 = vadd.f32 %v145, %v242
  %v244 = vpop.f32.mrf.mxu0
  %245 = vmatprep.mubr.bf16.mxu0 0
  %246 = vmatmul.mubr.bf16.gmra.mxu0 %v187
  %v247 = vpop.f32.mrf.mxu0
  %v248 = vadd.f32 %v150, %v247
  %v249 = vpop.f32.mrf.mxu0
  %v250 = vpop.f32.mrf.mxu0
  %v251 = vadd.f32 %v153, %v250
  %v252 = vpop.f32.mrf.mxu0
  %253 = vdwg.mxu0
  %v254 = vld [vmem:[%s4] sm:$0xff]
  %v255 = vld [vmem:[%s4 + $0x8] sm:$0xff]
  %v256 = vld [vmem:[%s4 + $0x10] sm:$0xff]
  %v257 = vld [vmem:[%s4 + $0x18] sm:$0xff]
  %v258 = vld [vmem:[%s4 + $0x20] sm:$0xff]
  %v259 = vld [vmem:[%s4 + $0x28] sm:$0xff]
  %v260 = vld [vmem:[%s4 + $0x30] sm:$0xff]
  %v261 = vld [vmem:[%s4 + $0x38] sm:$0xff]
  %263 = vset.pattern.permute.xlu0 0
  %264 = vperm.xlu0 %263, %v254
  %v265 = vpop.permute.xlu0 %264
  %268 = vset.pattern.permute.xlu0 0
  %269 = vperm.xlu0 %268, %v255
  %v270 = vpop.permute.xlu0 %269
  %273 = vset.pattern.permute.xlu0 0
  %274 = vperm.xlu0 %273, %v256
  %v275 = vpop.permute.xlu0 %274
  %278 = vset.pattern.permute.xlu0 0
  %279 = vperm.xlu0 %278, %v257
  %v280 = vpop.permute.xlu0 %279
  %283 = vset.pattern.permute.xlu0 0
  %284 = vperm.xlu0 %283, %v258
  %v285 = vpop.permute.xlu0 %284
  %288 = vset.pattern.permute.xlu0 0
  %289 = vperm.xlu0 %288, %v259
  %v290 = vpop.permute.xlu0 %289
  %293 = vset.pattern.permute.xlu0 0
  %294 = vperm.xlu0 %293, %v260
  %v295 = vpop.permute.xlu0 %294
  %298 = vset.pattern.permute.xlu0 0
  %299 = vperm.xlu0 %298, %v261
  %v300 = vpop.permute.xlu0 %299
  %v302 = vadd.f32 %v224, %v265
  %v303 = vadd.f32 %v227, %v270
  %v304 = vadd.f32 %v232, %v275
  %v305 = vadd.f32 %v235, %v280
  %v306 = vadd.f32 %v240, %v285
  %v307 = vadd.f32 %v243, %v290
  %v308 = vadd.f32 %v248, %v295
  %v309 = vadd.f32 %v251, %v300
  %v310 = vmax.f32 %v302, 0.0
  %v311 = vmax.f32 %v303, 0.0
  %v312 = vmax.f32 %v304, 0.0
  %v313 = vmax.f32 %v305, 0.0
  %v314 = vmax.f32 %v306, 0.0
  %v315 = vmax.f32 %v307, 0.0
  %v316 = vmax.f32 %v308, 0.0
  %v317 = vmax.f32 %v309, 0.0
  %v318 = vpack.c.bf16 %v311, %v310
  %v319 = vpack.c.bf16 %v313, %v312
  %v320 = vpack.c.bf16 %v315, %v314
  %v321 = vpack.c.bf16 %v317, %v316
  %v322 = vld [vmem:[%s5] sm:$0xf]
  %v323 = vld [vmem:[%s5 + $0x4] sm:$0xf]
  %v324 = vld [vmem:[%s5 + $0x8] sm:$0xf]
  %v325 = vld [vmem:[%s5 + $0xc] sm:$0xf]
  %v326 = vld [vmem:[%s5 + $0x10] sm:$0xf]
  %v327 = vld [vmem:[%s5 + $0x14] sm:$0xf]
  %v328 = vld [vmem:[%s5 + $0x18] sm:$0xf]
  %v329 = vld [vmem:[%s5 + $0x1c] sm:$0xf]
  %v330 = vld [vmem:[%s6] sm:$0xff]
  %v331 = vld [vmem:[%s6 + $0x8] sm:$0xff]
  %v332 = vld [vmem:[%s6 + $0x10] sm:$0xff]
  %v333 = vld [vmem:[%s6 + $0x18] sm:$0xff]
  %v334 = vld [vmem:[%s6 + $0x20] sm:$0xff]
  %v335 = vld [vmem:[%s6 + $0x28] sm:$0xff]
  %v336 = vld [vmem:[%s6 + $0x30] sm:$0xff]
  %v337 = vld [vmem:[%s6 + $0x38] sm:$0xff]
  %339 = vset.pattern.permute.xlu0 0
  %340 = vperm.xlu0 %339, %v330
  %v341 = vpop.permute.xlu0 %340
  %344 = vset.pattern.permute.xlu0 0
  %345 = vperm.xlu0 %344, %v331
  %v346 = vpop.permute.xlu0 %345
  %349 = vset.pattern.permute.xlu0 0
  %350 = vperm.xlu0 %349, %v332
  %v351 = vpop.permute.xlu0 %350
  %354 = vset.pattern.permute.xlu0 0
  %355 = vperm.xlu0 %354, %v333
  %v356 = vpop.permute.xlu0 %355
  %359 = vset.pattern.permute.xlu0 0
  %360 = vperm.xlu0 %359, %v334
  %v361 = vpop.permute.xlu0 %360
  %364 = vset.pattern.permute.xlu0 0
  %365 = vperm.xlu0 %364, %v335
  %v366 = vpop.permute.xlu0 %365
  %369 = vset.pattern.permute.xlu0 0
  %370 = vperm.xlu0 %369, %v336
  %v371 = vpop.permute.xlu0 %370
  %374 = vset.pattern.permute.xlu0 0
  %375 = vperm.xlu0 %374, %v337
  %v376 = vpop.permute.xlu0 %375
  %v386 = vunpack.c.l.b16 %v322
  %v387 = vunpack.c.l.b16 %v323
  %v388 = vunpack.c.l.b16 %v324
  %v389 = vunpack.c.l.b16 %v325
  %v390 = vunpack.c.l.b16 %v326
  %v391 = vunpack.c.l.b16 %v327
  %v392 = vunpack.c.l.b16 %v328
  %v393 = vunpack.c.l.b16 %v329
  %v394 = vpack.c.b16 %v387, %v386
  %v395 = vpack.c.b16 %v389, %v388
  %v396 = vpack.c.b16 %v391, %v390
  %v397 = vpack.c.b16 %v393, %v392
  %vm398 = vcmask 523264
  %v400 = vsel %vm398, %v394, 0
  %v403 = vsel %vm398, %v395, 0
  %v406 = vsel %vm398, %v396, 0
  %v409 = vsel %vm398, %v397, 0
  %411 = vmatprep.subr.bf16.mxu0 0
  %412 = vmatpush1.bf16.msra.mxu0 0
  %413 = vmatprep.subr.bf16.mxu0 0
  %414 = vmatpush1.bf16.msra.mxu0 0
  %415 = vmatprep.subr.bf16.mxu0 0
  %416 = vmatpush1.bf16.msra.mxu0 0
  %417 = vmatprep.subr.bf16.mxu0 0
  %418 = vmatpush1.bf16.msra.mxu0 0
  %419 = vmatprep.subr.bf16.mxu0 0
  %420 = vmatpush1.bf16.msra.mxu0 %v321
  %421 = vmatprep.subr.bf16.mxu0 0
  %422 = vmatpush1.bf16.msra.mxu0 %v320
  %423 = vmatprep.subr.bf16.mxu0 0
  %424 = vmatpush1.bf16.msra.mxu0 %v319
  %425 = vmatprep.subr.bf16.mxu0 0
  %426 = vmatpush1.bf16.msra.mxu0 %v318
  %427 = vmatprep.subr.bf16.mxu0 0
  %428 = vmatpush2.bf16.msra.mxu0 0
  %429 = vmatprep.subr.bf16.mxu0 0
  %430 = vmatpush2.bf16.msra.mxu0 0
  %431 = vmatprep.subr.bf16.mxu0 0
  %432 = vmatpush2.bf16.msra.mxu0 0
  %433 = vmatprep.subr.bf16.mxu0 0
  %434 = vmatpush2.bf16.msra.mxu0 0
  %435 = vmatprep.subr.bf16.mxu0 0
  %436 = vmatpush2.bf16.msra.mxu0 0
  %437 = vmatprep.subr.bf16.mxu0 0
  %438 = vmatpush2.bf16.msra.mxu0 0
  %439 = vmatprep.subr.bf16.mxu0 0
  %440 = vmatpush2.bf16.msra.mxu0 0
  %441 = vmatprep.subr.bf16.mxu0 0
  %442 = vmatpush2.bf16.msra.mxu0 0
  %443 = vmatprep.mubr.bf16.mxu0 0
  %444 = vmatmul.mubr.bf16.gmra.mxu0 %v400
  %v445 = vpop.f32.mrf.mxu0
  %v446 = vadd.f32 %v341, %v445
  %v447 = vpop.f32.mrf.mxu0
  %v448 = vpop.f32.mrf.mxu0
  %v449 = vadd.f32 %v346, %v448
  %v450 = vpop.f32.mrf.mxu0
  %451 = vmatprep.mubr.bf16.mxu0 0
  %452 = vmatmul.mubr.bf16.gmra.mxu0 %v403
  %v453 = vpop.f32.mrf.mxu0
  %v454 = vadd.f32 %v351, %v453
  %v455 = vpop.f32.mrf.mxu0
  %v456 = vpop.f32.mrf.mxu0
  %v457 = vadd.f32 %v356, %v456
  %v458 = vpop.f32.mrf.mxu0
  %459 = vmatprep.mubr.bf16.mxu0 0
  %460 = vmatmul.mubr.bf16.gmra.mxu0 %v406
  %v461 = vpop.f32.mrf.mxu0
  %v462 = vadd.f32 %v361, %v461
  %v463 = vpop.f32.mrf.mxu0
  %v464 = vpop.f32.mrf.mxu0
  %v465 = vadd.f32 %v366, %v464
  %v466 = vpop.f32.mrf.mxu0
  %467 = vmatprep.mubr.bf16.mxu0 0
  %468 = vmatmul.mubr.bf16.gmra.mxu0 %v409
  %v469 = vpop.f32.mrf.mxu0
  %v470 = vadd.f32 %v371, %v469
  %v471 = vpop.f32.mrf.mxu0
  %v472 = vpop.f32.mrf.mxu0
  %v473 = vadd.f32 %v376, %v472
  %v474 = vpop.f32.mrf.mxu0
  %475 = vdwg.mxu0
  %v476 = vmax.f32 %v446, 0.0
  %v477 = vmax.f32 %v449, 0.0
  %v478 = vmax.f32 %v454, 0.0
  %v479 = vmax.f32 %v457, 0.0
  %v480 = vmax.f32 %v462, 0.0
  %v481 = vmax.f32 %v465, 0.0
  %v482 = vmax.f32 %v470, 0.0
  %v483 = vmax.f32 %v473, 0.0
  %v484 = vpack.c.bf16 %v477, %v476
  %v485 = vpack.c.bf16 %v479, %v478
  %v486 = vpack.c.bf16 %v481, %v480
  %v487 = vpack.c.bf16 %v483, %v482
  %v488 = vld [vmem:[%s7] sm:$0xf]
  %v489 = vld [vmem:[%s7 + $0x4] sm:$0xf]
  %v490 = vld [vmem:[%s8] sm:$0xff]
  %v491 = vld [vmem:[%s8 + $0x8] sm:$0xff]
  %493 = vset.pattern.permute.xlu0 0
  %494 = vperm.xlu0 %493, %v490
  %v495 = vpop.permute.xlu0 %494
  %498 = vset.pattern.permute.xlu0 0
  %499 = vperm.xlu0 %498, %v491
  %v500 = vpop.permute.xlu0 %499
  %v504 = vunpack.c.l.b16 %v488
  %v505 = vunpack.c.l.b16 %v489
  %v506 = vpack.c.b16 %v505, %v504
  %v508 = vsel %vm398, %v506, 0
  %510 = vmatprep.subr.bf16.mxu0 0
  %511 = vmatpush1.bf16.msra.mxu0 0
  %512 = vmatprep.subr.bf16.mxu0 0
  %513 = vmatpush1.bf16.msra.mxu0 0
  %514 = vmatprep.subr.bf16.mxu0 0
  %515 = vmatpush1.bf16.msra.mxu0 0
  %516 = vmatprep.subr.bf16.mxu0 0
  %517 = vmatpush1.bf16.msra.mxu0 0
  %518 = vmatprep.subr.bf16.mxu0 0
  %519 = vmatpush1.bf16.msra.mxu0 %v487
  %520 = vmatprep.subr.bf16.mxu0 0
  %521 = vmatpush1.bf16.msra.mxu0 %v486
  %522 = vmatprep.subr.bf16.mxu0 0
  %523 = vmatpush1.bf16.msra.mxu0 %v485
  %524 = vmatprep.subr.bf16.mxu0 0
  %525 = vmatpush1.bf16.msra.mxu0 %v484
  %526 = vmatprep.subr.bf16.mxu0 0
  %527 = vmatpush2.bf16.msra.mxu0 0
  %528 = vmatprep.subr.bf16.mxu0 0
  %529 = vmatpush2.bf16.msra.mxu0 0
  %530 = vmatprep.subr.bf16.mxu0 0
  %531 = vmatpush2.bf16.msra.mxu0 0
  %532 = vmatprep.subr.bf16.mxu0 0
  %533 = vmatpush2.bf16.msra.mxu0 0
  %534 = vmatprep.subr.bf16.mxu0 0
  %535 = vmatpush2.bf16.msra.mxu0 0
  %536 = vmatprep.subr.bf16.mxu0 0
  %537 = vmatpush2.bf16.msra.mxu0 0
  %538 = vmatprep.subr.bf16.mxu0 0
  %539 = vmatpush2.bf16.msra.mxu0 0
  %540 = vmatprep.subr.bf16.mxu0 0
  %541 = vmatpush2.bf16.msra.mxu0 0
  %542 = vmatprep.mubr.bf16.mxu0 0
  %543 = vmatmul.mubr.bf16.gmra.mxu0 %v508
  %v544 = vpop.f32.mrf.mxu0
  %v545 = vadd.f32 %v495, %v544
  %v546 = vpop.f32.mrf.mxu0
  %v547 = vpop.f32.mrf.mxu0
  %v548 = vadd.f32 %v500, %v547
  %v549 = vpop.f32.mrf.mxu0
  %550 = vdwg.mxu0
  %551 = vst [vmem:[%s9] sm:$0xff] %v545
  %552 = vst [vmem:[%s9 + $0x8] sm:$0xff] %v548
  // Predicated region
  $region38: #{dynamics_net_forward.1} parent=0 // pred_check
    _
  $region39: #{dynamics_net_forward.1} parent=0 // pred_check_branch
    %554 = sbr.rel (0) target = $region41
  $region40: #{dynamics_net_forward.1} parent=0 // pred_region
    _
  $region41: #{dynamics_net_forward.1} parent=0 // pred_fallthru
    _
  // Predicated region
  $region42: #{dynamics_net_forward.1} parent=0 // pred_check
    _
  $region43: #{dynamics_net_forward.1} parent=0 // pred_check_branch
    %556 = sbr.rel (0) target = $region45
  $region44: #{dynamics_net_forward.1} parent=0 // pred_region
    _
  $region45: #{dynamics_net_forward.1} parent=0 // pred_fallthru
    _

</llo_original>
